<compile_context>
chip_gen: v5e
topology: v5e:2x2
jax: 0.10.0
libtpu: 0.0.40
codegen_flags: <defaults>
</compile_context>

<pallas_src>
import functools

import jax
import jax.numpy as jnp
from jax.experimental import pallas as pl
from jax.experimental.pallas import tpu as pltpu

_LANES = 128
_MAX_BLOCK_ROWS = 1024  # (1024, 128) f32 tile = 512 KiB


def _round_up(x, m):
    return ((x + m - 1) // m) * m


def _dice_kernel(x_ref, t_ref, o_ref, acc_pt, acc_sum, *,
                 smooth, n_valid, block_rows, use_mask):
    i = pl.program_id(0)

    @pl.when(i == 0)
    def _():
        acc_pt[...] = jnp.zeros_like(acc_pt)
        acc_sum[...] = jnp.zeros_like(acc_sum)

    x = x_ref[...].astype(jnp.float32)
    t = t_ref[...].astype(jnp.float32)
    p = jax.nn.sigmoid(x)

    if use_mask:
        # Static (trace-time) decision: only emitted when the total element
        # count does not tile evenly.  Masks both the ragged lane tail and
        # any out-of-bounds rows of the final (partial) block, whose
        # contents are undefined.
        row = jax.lax.broadcasted_iota(jnp.int32, (block_rows, _LANES), 0)
        lane = jax.lax.broadcasted_iota(jnp.int32, (block_rows, _LANES), 1)
        idx = (i * block_rows + row) * _LANES + lane
        valid = idx < n_valid
        p = jnp.where(valid, p, 0.0)
        t = jnp.where(valid, t, 0.0)

    # Per-step work stays on the VPU: two accumulator read-modify-writes.
    acc_pt[...] += p * t
    acc_sum[...] += p + t

    @pl.when(i == pl.num_programs(0) - 1)
    def _():
        inter = jnp.sum(acc_pt[...])
        denom = jnp.sum(acc_sum[...]) + smooth
        o_ref[0] = 1.0 - (2.0 * inter + smooth) / denom


def dice_loss(inputs, targets, smooth=1.0):
    """Pallas TPU implementation of DiceLoss.forward (returns an f32 scalar)."""
    x = jnp.reshape(inputs, (-1,))      # keep native dtype; no astype copy
    t = jnp.reshape(targets, (-1,))
    n = x.shape[0]

    rows = pl.cdiv(n, _LANES)
    lane_pad = rows * _LANES - n
    if lane_pad:
        # Rare path (numel not a multiple of 128).  Pad values are irrelevant
        # because the kernel masks everything with flat index >= n.
        x = jnp.pad(x, (0, lane_pad))
        t = jnp.pad(t, (0, lane_pad))

    x2 = x.reshape(rows, _LANES)
    t2 = t.reshape(rows, _LANES)

    block_rows = min(_MAX_BLOCK_ROWS, _round_up(rows, 8))
    grid = (pl.cdiv(rows, block_rows),)
    use_mask = (n % (block_rows * _LANES)) != 0

    kernel = functools.partial(
        _dice_kernel,
        smooth=float(smooth),
        n_valid=n,
        block_rows=block_rows,
        use_mask=use_mask,
    )

    out = pl.pallas_call(
        kernel,
        out_shape=jax.ShapeDtypeStruct((1,), jnp.float32),
        grid_spec=pltpu.PrefetchScalarGridSpec(
            num_scalar_prefetch=0,
            grid=grid,
            in_specs=[
                pl.BlockSpec((block_rows, _LANES), lambda i: (i, 0)),
                pl.BlockSpec((block_rows, _LANES), lambda i: (i, 0)),
            ],
            out_specs=pl.BlockSpec(memory_space=pltpu.SMEM),
            scratch_shapes=[
                pltpu.VMEM((block_rows, _LANES), jnp.float32),
                pltpu.VMEM((block_rows, _LANES), jnp.float32),
            ],
        ),
        compiler_params=pltpu.CompilerParams(
            dimension_semantics=("arbitrary",),
        ),
    )(x2, t2)
    return out[0]


def _reference(inputs, targets, smooth=1.0):
    p = jax.nn.sigmoid(inputs.astype(jnp.float32)).reshape(-1)
    t = targets.astype(jnp.float32).reshape(-1)
    inter = jnp.sum(p * t)
    dice = (2.0 * inter + smooth) / (jnp.sum(p) + jnp.sum(t) + smooth)
    return 1.0 - dice


if __name__ == "__main__":
    key = jax.random.PRNGKey(0)
    k1, k2 = jax.random.split(key)
    # Small NCHW shapes consistent with a segmentation logit/target pair.
    x = jax.random.normal(k1, (2, 4, 16, 16), dtype=jnp.float32)
    tgt = (jax.random.uniform(k2, (2, 4, 16, 16)) > 0.5).astype(jnp.float32)

    loss = jax.block_until_ready(dice_loss(x, tgt))
    ref = jax.block_until_ready(_reference(x, tgt))
    assert jnp.allclose(loss, ref, atol=1e-5, rtol=1e-5), (loss, ref)
    print("KERNEL_OK")
</pallas_src>

<mosaic_0001>
module attributes {stable_mosaic.version = 11 : i64} {
  func.func @_dice_kernel(%arg0: i32, %arg1: memref<16x128xf32, #tpu.memory_space<vmem>>, %arg2: memref<16x128xf32, #tpu.memory_space<vmem>>, %arg3: memref<1xf32, #tpu.memory_space<smem>>, %arg4: memref<16x128xf32, #tpu.memory_space<vmem>>, %arg5: memref<16x128xf32, #tpu.memory_space<vmem>>) attributes {dimension_semantics = [#tpu.dimension_semantics<arbitrary>], iteration_bounds = array<i64: 1>, scalar_prefetch = 0 : i64, scratch_operands = 2 : i64, tpu.core_type = #tpu.core_type<tc>, window_params = [{transform_indices = @transform_0, window_bounds = array<i64: 16, 128>}, {transform_indices = @transform_1, window_bounds = array<i64: 16, 128>}, {transform_indices = @transform_2, window_bounds = array<i64: 1>}]} {
    %c0_i32 = arith.constant 0 : i32
    %0 = arith.cmpi eq, %arg0, %c0_i32 : i32
    %1 = arith.extui %0 : i1 to i32
    %c0_i32_0 = arith.constant 0 : i32
    %2 = arith.cmpi ne, %1, %c0_i32_0 : i32
    scf.if %2 {
      %cst_14 = arith.constant 0.000000e+00 : f32
      %21 = vector.broadcast %cst_14 : f32 to vector<16x128xf32>
      %c0_15 = arith.constant 0 : index
      %c0_16 = arith.constant 0 : index
      %22 = vector.load %arg4[%c0_15, %c0_16] : memref<16x128xf32, #tpu.memory_space<vmem>>, vector<16x128xf32>
      tpu.vector_store %arg4[%c0_15, %c0_16], %21 {strides = array<i32>} : memref<16x128xf32, #tpu.memory_space<vmem>>, vector<16x128xf32>,
      %cst_17 = arith.constant 0.000000e+00 : f32
      %23 = vector.broadcast %cst_17 : f32 to vector<16x128xf32>
      %c0_18 = arith.constant 0 : index
      %c0_19 = arith.constant 0 : index
      %24 = vector.load %arg5[%c0_18, %c0_19] : memref<16x128xf32, #tpu.memory_space<vmem>>, vector<16x128xf32>
      tpu.vector_store %arg5[%c0_18, %c0_19], %23 {strides = array<i32>} : memref<16x128xf32, #tpu.memory_space<vmem>>, vector<16x128xf32>,
    } else {
    }
    %c0 = arith.constant 0 : index
    %c0_1 = arith.constant 0 : index
    %3 = vector.load %arg1[%c0, %c0_1] : memref<16x128xf32, #tpu.memory_space<vmem>>, vector<16x128xf32>
    %c0_2 = arith.constant 0 : index
    %c0_3 = arith.constant 0 : index
    %4 = vector.load %arg2[%c0_2, %c0_3] : memref<16x128xf32, #tpu.memory_space<vmem>>, vector<16x128xf32>
    %5 = arith.negf %3 : vector<16x128xf32>
    %6 = math.exp %5 : vector<16x128xf32>
    %cst = arith.constant 1.000000e+00 : f32
    %7 = vector.broadcast %cst : f32 to vector<16x128xf32>
    %8 = arith.addf %7, %6 : vector<16x128xf32>
    %9 = arith.divf %7, %8 : vector<16x128xf32>
    %c0_4 = arith.constant 0 : index
    %c0_5 = arith.constant 0 : index
    %10 = vector.load %arg4[%c0_4, %c0_5] : memref<16x128xf32, #tpu.memory_space<vmem>>, vector<16x128xf32>
    %11 = arith.mulf %9, %4 : vector<16x128xf32>
    %12 = arith.addf %10, %11 : vector<16x128xf32>
    %c0_6 = arith.constant 0 : index
    %c0_7 = arith.constant 0 : index
    %13 = vector.load %arg4[%c0_6, %c0_7] : memref<16x128xf32, #tpu.memory_space<vmem>>, vector<16x128xf32>
    tpu.vector_store %arg4[%c0_6, %c0_7], %12 {strides = array<i32>} : memref<16x128xf32, #tpu.memory_space<vmem>>, vector<16x128xf32>,
    %c0_8 = arith.constant 0 : index
    %c0_9 = arith.constant 0 : index
    %14 = vector.load %arg5[%c0_8, %c0_9] : memref<16x128xf32, #tpu.memory_space<vmem>>, vector<16x128xf32>
    %15 = arith.addf %9, %4 : vector<16x128xf32>
    %16 = arith.addf %14, %15 : vector<16x128xf32>
    %c0_10 = arith.constant 0 : index
    %c0_11 = arith.constant 0 : index
    %17 = vector.load %arg5[%c0_10, %c0_11] : memref<16x128xf32, #tpu.memory_space<vmem>>, vector<16x128xf32>
    tpu.vector_store %arg5[%c0_10, %c0_11], %16 {strides = array<i32>} : memref<16x128xf32, #tpu.memory_space<vmem>>, vector<16x128xf32>,
    %c0_i32_12 = arith.constant 0 : i32
    %18 = arith.cmpi eq, %arg0, %c0_i32_12 : i32
    %19 = arith.extui %18 : i1 to i32
    %c0_i32_13 = arith.constant 0 : i32
    %20 = arith.cmpi ne, %19, %c0_i32_13 : i32
    scf.if %20 {
      %c0_14 = arith.constant 0 : index
      %c0_15 = arith.constant 0 : index
      %21 = vector.load %arg4[%c0_14, %c0_15] : memref<16x128xf32, #tpu.memory_space<vmem>>, vector<16x128xf32>
      %22 = vector.shape_cast %21 : vector<16x128xf32> to vector<1x16x128xf32>
      %cst_16 = arith.constant dense<0.000000e+00> : vector<1xf32>
      %23 = vector.multi_reduction <add>, %22, %cst_16 [1, 2] : vector<1x16x128xf32> to vector<1xf32>
      %24 = vector.shape_cast %23 : vector<1xf32> to vector<1x1x1xf32>
      %25 = vector.extract %24[0, 0, 0] : f32 from vector<1x1x1xf32>
      %c0_17 = arith.constant 0 : index
      %c0_18 = arith.constant 0 : index
      %26 = vector.load %arg5[%c0_17, %c0_18] : memref<16x128xf32, #tpu.memory_space<vmem>>, vector<16x128xf32>
      %27 = vector.shape_cast %26 : vector<16x128xf32> to vector<1x16x128xf32>
      %cst_19 = arith.constant dense<0.000000e+00> : vector<1xf32>
      %28 = vector.multi_reduction <add>, %27, %cst_19 [1, 2] : vector<1x16x128xf32> to vector<1xf32>
      %29 = vector.shape_cast %28 : vector<1xf32> to vector<1x1x1xf32>
      %30 = vector.extract %29[0, 0, 0] : f32 from vector<1x1x1xf32>
      %cst_20 = arith.constant 1.000000e+00 : f32
      %31 = arith.addf %30, %cst_20 : f32
      %cst_21 = arith.constant 2.000000e+00 : f32
      %32 = arith.mulf %cst_21, %25 : f32
      %cst_22 = arith.constant 1.000000e+00 : f32
      %33 = arith.addf %32, %cst_22 : f32
      %34 = arith.divf %33, %31 : f32
      %cst_23 = arith.constant 1.000000e+00 : f32
      %35 = arith.subf %cst_23, %34 : f32
      %c0_24 = arith.constant 0 : index
      %36 = memref.load %arg3[%c0_24] : memref<1xf32, #tpu.memory_space<smem>>
      memref.store %35, %arg3[%c0_24] : memref<1xf32, #tpu.memory_space<smem>>
    } else {
    }
    return
  }
  func.func @transform_0(%arg0: i32) -> (i32, i32) {
    %c0_i32 = arith.constant 0 : i32
    %c0_i32_0 = arith.constant 0 : i32
    return %arg0, %c0_i32 : i32, i32
  }
  func.func @transform_1(%arg0: i32) -> (i32, i32) {
    %c0_i32 = arith.constant 0 : i32
    %c0_i32_0 = arith.constant 0 : i32
    return %arg0, %c0_i32 : i32, i32
  }
  func.func @transform_2(%arg0: i32) -> i32 {
    %c0_i32 = arith.constant 0 : i32
    %c0_i32_0 = arith.constant 0 : i32
    return %c0_i32 : i32
  }
}

</mosaic_0001>

<llo_original>
// kernel: tpu_custom_call.1
$region0: #{tpu_custom_call.1}
  #allocation0 [shape = 'u32[]', space=smem, size = 0x4, offset = 0x4, fixed_abs, tag = 'smem constant byte address 0x4 - core index']
  #allocation1 [shape = 'u32[72,128]{1,0:T(1,128)}', space=vmem, size = 0x9000, scoped, tag = 'internal scratch']
  #allocation2 [shape = 'f32[16,128]{1,0:T(8,128)}', space=vmem, size = 0x2000, scoped, tag = 'scratch operand']
  #allocation3 [shape = 'f32[16,128]{1,0:T(8,128)}', space=vmem, size = 0x2000, scoped, tag = 'scratch operand']
  %s0 = inlined_call_operand.hbm [shape: f32[16,128], index: 0, kind: input, shape index: {}]
  %s1 = inlined_call_operand.hbm [shape: f32[16,128], index: 1, kind: input, shape index: {}]
  %s2 = inlined_call_operand.hbm [shape: f32[1], index: 2, kind: output, shape index: {}]
  %s3 = sld [smem:[#allocation0]]
  $region34: #{tpu_custom_call.1} parent=0
    _
  %s5 = ssub.s32 1, %s3
  %s6 = scalar_select 0, %s5, %s3
  $region1: #{tpu_custom_call.1} parent=0
    #allocation4 [shape = 'u8[8192]{0}', space=vmem, size = 0x2000, scoped, tag = 'input window, operand 0, single buffered']
    #allocation5 [shape = 's32[1]{0}', space=sflag, size = 0x4, scoped, tag = 'scoped memory for tpu_custom_call.1']
    #allocation6 [shape = 's32[1]{0}', space=sflag, size = 0x4, scoped, tag = 'scoped memory for tpu_custom_call.1']
    #allocation7 [shape = 'u8[8192]{0}', space=vmem, size = 0x2000, scoped, tag = 'input window, operand 1, single buffered']
    #allocation8 [shape = 's32[1]{0}', space=sflag, size = 0x4, scoped, tag = 'scoped memory for tpu_custom_call.1']
    #allocation9 [shape = 'u8[512]{0}', space=smem, size = 0x200, scoped, tag = 'output window, operand 0, single buffered']
    %7 = vsyncpa [#allocation5], 0
    %8 = vsyncpa [#allocation8], 0
    %9 = vsyncpa [#allocation6], 0
    // Predicated region
    $region2: #{tpu_custom_call.1} parent=1 // pred_check
      _
    $region3: #{tpu_custom_call.1} parent=1 // pred_check_branch
      %11 = sbr.rel (0) target = $region5
    $region4: #{tpu_custom_call.1} parent=1 // pred_region
      %13 = vsyncadd [#allocation5], 0
      %s14 = sshll.u32 %s0, 4
      %s15 = int_to_ptr.hbm [resolvable:$true] %s14
      %s16 = sshll.u32 [#allocation4], 4
      %s17 = int_to_ptr.vmem [resolvable:$true] %s16
      %22 = dma.hbm_to_vmem [thread:$0]  %s15, 256, %s17, [#allocation5], 128, 128, 8
    $region5: #{tpu_custom_call.1} parent=1 // pred_fallthru
      _
    // Predicated region
    $region6: #{tpu_custom_call.1} parent=1 // pred_check
      _
    $region7: #{tpu_custom_call.1} parent=1 // pred_check_branch
      %24 = sbr.rel (0) target = $region9
    $region8: #{tpu_custom_call.1} parent=1 // pred_region
      %26 = vsyncadd [#allocation8], 0
      %s27 = sshll.u32 %s1, 4
      %s28 = int_to_ptr.hbm [resolvable:$true] %s27
      %s29 = sshll.u32 [#allocation7], 4
      %s30 = int_to_ptr.vmem [resolvable:$true] %s29
      %35 = dma.hbm_to_vmem [thread:$0]  %s28, 256, %s30, [#allocation8], 128, 128, 8
    $region9: #{tpu_custom_call.1} parent=1 // pred_fallthru
      _
    // Predicated region
    $region10: #{tpu_custom_call.1} parent=1 // pred_check
      _
    $region11: #{tpu_custom_call.1} parent=1 // pred_check_branch
      %37 = sbr.rel (0) target = $region13
    $region12: #{tpu_custom_call.1} parent=1 // pred_region
      %39 = dma.done [#allocation5], 256
    $region13: #{tpu_custom_call.1} parent=1 // pred_fallthru
      _
    // Predicated region
    $region14: #{tpu_custom_call.1} parent=1 // pred_check
      _
    $region15: #{tpu_custom_call.1} parent=1 // pred_check_branch
      %41 = sbr.rel (0) target = $region17
    $region16: #{tpu_custom_call.1} parent=1 // pred_region
      %43 = dma.done [#allocation8], 256
    $region17: #{tpu_custom_call.1} parent=1 // pred_fallthru
      _
    %p44 = scmp.eq.s32.totalorder 0, 0
    // Predicated region
    $region18: #{tpu_custom_call.1} parent=1 // pred_check
      %p45 = pneg %p44
    $region19: #{tpu_custom_call.1} parent=1 // pred_check_branch
      %47 = sbr.rel (%p45) target = $region21
    $region20: #{tpu_custom_call.1} parent=1 // pred_region
      %48 = vst [vmem:[#allocation2] sm:$0xff] 0.0
      %49 = vst [vmem:[#allocation2 + $0x8] sm:$0xff] 0.0
      %50 = vst [vmem:[#allocation3] sm:$0xff] 0.0
      %51 = vst [vmem:[#allocation3 + $0x8] sm:$0xff] 0.0
    $region21: #{tpu_custom_call.1} parent=1 // pred_fallthru
      _
    %v52 = vld [vmem:[#allocation4] sm:$0xff]
    %v53 = vld [vmem:[#allocation4 + $0x8] sm:$0xff]
    %v54 = vld [vmem:[#allocation7] sm:$0xff]
    %v55 = vld [vmem:[#allocation7 + $0x8] sm:$0xff]
    %v56 = vxor.u32 %v52, 2147483648
    %v57 = vxor.u32 %v53, 2147483648
    %v58 = vmul.f32 %v56, 1.442695
    %v59 = vpow.pop %v58
    %v60 = vmul.f32 %v57, 1.442695
    %v61 = vpow.pop %v60
    %v62 = vadd.f32 %v59, 1.0
    %v63 = vadd.f32 %v61, 1.0
    %v64 = vrcp.pop %v62
    %v65 = vmul.f32 %v62, %v64
    %v66 = vsub.f32 1.0, %v65
    %v67 = vmul.f32 %v64, %v66
    %v68 = vadd.f32 %v64, %v67
    %vm69 = vweird.f32 %v62
    %vm70 = vweird.f32 %v64
    %vm71 = vmor %vm69, %vm70
    %v72 = vsel %vm71, %v64, %v68
    %v73 = vand.u32 2147483647, %v62
    %vm74 = vcmp.eq.f32.partialorder %v73, 8.507059e+37
    %v75 = vand.u32 %v62, 2147483648
    %v76 = vor.u32 1.1754944e-38, %v75
    %v77 = vsel %vm74, %v76, %v72
    %v78 = vmul.f32 1.0, %v77
    %v79 = vrcp.pop %v63
    %v80 = vmul.f32 %v63, %v79
    %v81 = vsub.f32 1.0, %v80
    %v82 = vmul.f32 %v79, %v81
    %v83 = vadd.f32 %v79, %v82
    %vm84 = vweird.f32 %v63
    %vm85 = vweird.f32 %v79
    %vm86 = vmor %vm84, %vm85
    %v87 = vsel %vm86, %v79, %v83
    %v88 = vand.u32 2147483647, %v63
    %vm89 = vcmp.eq.f32.partialorder %v88, 8.507059e+37
    %v90 = vand.u32 %v63, 2147483648
    %v91 = vor.u32 1.1754944e-38, %v90
    %v92 = vsel %vm89, %v91, %v87
    %v93 = vmul.f32 1.0, %v92
    %v94 = vld [vmem:[#allocation2] sm:$0xff]
    %v95 = vld [vmem:[#allocation2 + $0x8] sm:$0xff]
    %v96 = vmul.f32 %v78, %v54
    %v97 = vmul.f32 %v93, %v55
    %v98 = vadd.f32 %v94, %v96
    %v99 = vadd.f32 %v95, %v97
    %100 = vst [vmem:[#allocation2] sm:$0xff] %v98
    %101 = vst [vmem:[#allocation2 + $0x8] sm:$0xff] %v99
    %v102 = vld [vmem:[#allocation3] sm:$0xff]
    %v103 = vld [vmem:[#allocation3 + $0x8] sm:$0xff]
    %v104 = vadd.f32 %v78, %v54
    %v105 = vadd.f32 %v93, %v55
    %v106 = vadd.f32 %v102, %v104
    %v107 = vadd.f32 %v103, %v105
    %108 = vst [vmem:[#allocation3] sm:$0xff] %v106
    %109 = vst [vmem:[#allocation3 + $0x8] sm:$0xff] %v107
    // Predicated region
    $region22: #{tpu_custom_call.1} parent=1 // pred_check
      %p110 = pneg %p44
    $region23: #{tpu_custom_call.1} parent=1 // pred_check_branch
      %112 = sbr.rel (%p110) target = $region25
    $region24: #{tpu_custom_call.1} parent=1 // pred_region
      %v113 = vld [vmem:[#allocation2] sm:$0xff]
      %v114 = vld [vmem:[#allocation2 + $0x8] sm:$0xff]
      %v115 = vadd.f32 %v113, %v114
      %116 = vadd.xlane.f32.xlu0 %v115
      %v117 = vpop.xlane.xlu0 %116
      %v118 = vrot.slane %v117, 4
      %v119 = vadd.f32 %v117, %v118
      %v120 = vrot.slane %v119, 2
      %v121 = vadd.f32 %v119, %v120
      %v122 = vrot.slane %v121, 1
      %v123 = vadd.f32 %v121, %v122
      %s124 = vtos %v123
      %v125 = vld [vmem:[#allocation3] sm:$0xff]
      %v126 = vld [vmem:[#allocation3 + $0x8] sm:$0xff]
      %v127 = vadd.f32 %v125, %v126
      %128 = vadd.xlane.f32.xlu0 %v127
      %v129 = vpop.xlane.xlu0 %128
      %v130 = vrot.slane %v129, 4
      %v131 = vadd.f32 %v129, %v130
      %v132 = vrot.slane %v131, 2
      %v133 = vadd.f32 %v131, %v132
      %v134 = vrot.slane %v133, 1
      %v135 = vadd.f32 %v133, %v134
      %s136 = vtos %v135
      %s137 = sadd.f32 %s136, 1.0
      %s138 = smul.f32 %s124, 2.0
      %s139 = sadd.f32 %s138, 1.0
      %v140 = vstv %s137
      %v141 = vrcp.pop %v140
      %v142 = vmul.f32 %v140, %v141
      %v143 = vsub.f32 1.0, %v142
      %v144 = vmul.f32 %v141, %v143
      %v145 = vadd.f32 %v141, %v144
      %vm146 = vweird.f32 %v140
      %vm147 = vweird.f32 %v141
      %vm148 = vmor %vm146, %vm147
      %v149 = vsel %vm148, %v141, %v145
      %v150 = vand.u32 2147483647, %v140
      %vm151 = vcmp.eq.f32.partialorder %v150, 8.507059e+37
      %v152 = vand.u32 %v140, 2147483648
      %v153 = vor.u32 1.1754944e-38, %v152
      %v154 = vsel %vm151, %v153, %v149
      %s155 = vtos %v154
      %s156 = smul.f32 %s139, %s155
      %s157 = ssub.f32 1.0, %s156
      %s158 = scalar_lea.smem [#allocation9], 0
      %159 = sst [smem:[%s158]] %s157
    $region25: #{tpu_custom_call.1} parent=1 // pred_fallthru
      _
    // Predicated region
    $region26: #{tpu_custom_call.1} parent=1 // pred_check
      _
    $region27: #{tpu_custom_call.1} parent=1 // pred_check_branch
      %161 = sbr.rel (0) target = $region29
    $region28: #{tpu_custom_call.1} parent=1 // pred_region
      %163 = vsyncadd [#allocation6], 0
      %s165 = sshll.u32 %s2, 4
      %s166 = int_to_ptr.hbm [resolvable:$true] %s165
      %168 = dma.smem_to_hbm [#allocation9], 16, %s166, [#allocation6]
    $region29: #{tpu_custom_call.1} parent=1 // pred_fallthru
      _
    // Predicated region
    $region30: #{tpu_custom_call.1} parent=1 // pred_check
      _
    $region31: #{tpu_custom_call.1} parent=1 // pred_check_branch
      %170 = sbr.rel (0) target = $region33
    $region32: #{tpu_custom_call.1} parent=1 // pred_region
      %172 = dma.done [#allocation6], 16
    $region33: #{tpu_custom_call.1} parent=1 // pred_fallthru
      _
    %173 = sfence
    %174 = vsyncpa [#allocation5], 1
    %175 = vsyncpa [#allocation8], 1
    %176 = vsyncpa [#allocation6], 1

</llo_original>
